<compile_context>
chip_gen: v7x
topology: tpu7x:2x2x1
jax: 0.10.0
libtpu: 0.0.40
codegen_flags: <defaults>
</compile_context>

<pallas_src>
import jax
import jax.numpy as jnp
from jax.experimental import pallas as pl
from jax.experimental.pallas import tpu as pltpu


def _blender_kernel(scale_ref, x_ref, w_ref, o_ref):
    """scale_ref: [tm, E] f32, x_ref: [E, tm, D] bf16, w_ref: [E, D, D] bf16,
    o_ref: [tm, D] f32."""
    num_experts = x_ref.shape[0]
    acc = None
    for e in range(num_experts):                 # static unroll, E is small
        y = jnp.dot(x_ref[e], w_ref[e],
                    preferred_element_type=jnp.float32)      # [tm, D] on MXU
        contrib = scale_ref[:, e:e + 1] * y                   # [tm,1]*[tm,D] VPU
        acc = contrib if acc is None else acc + contrib
    o_ref[...] = acc.astype(o_ref.dtype)


def _pick_block_m(m: int) -> int:
    for cand in (512, 256, 128, 64, 32, 16, 8):
        if m % cand == 0:
            return cand
    return m


def bart_blender(hidden_states, blend_factor, weights_t):
    """hidden_states: [E, B, S, D]; blend_factor: [B, E]; weights_t: [E, D, D]
    (W_e.T gathered for the active experts). Returns [B, S, D] float32."""
    E, B, S, D = hidden_states.shape
    assert blend_factor.shape == (B, E)
    assert weights_t.shape == (E, D, D)

    M = B * S
    tm = _pick_block_m(M)
    # v7x has 2 TensorCores: keep >=2 parallel grid steps when it costs nothing.
    if M // tm == 1 and tm % 16 == 0:
        tm //= 2
    grid = (M // tm,)

    # Layout plumbing (XLA side): fold (B, S) -> M, cast matmul operands to bf16.
    x = hidden_states.reshape(E, M, D).astype(jnp.bfloat16)
    w = weights_t.astype(jnp.bfloat16)
    # Per-row blend scale: row m = b*S + s  ->  blend_factor[b, :].
    scale = jnp.repeat(blend_factor.astype(jnp.float32), S, axis=0)   # [M, E]

    # VMEM working set (bf16 x tile + resident weights + f32 out tile) is well
    # under the scoped default at these sizes; for very large D, tile the weight
    # along its output dim and raise vmem_limit_bytes.
    grid_spec = pltpu.PrefetchScalarGridSpec(
        num_scalar_prefetch=0,
        grid=grid,
        in_specs=[
            pl.BlockSpec((tm, E), lambda i: (i, 0)),         # scale  [M, E]
            pl.BlockSpec((E, tm, D), lambda i: (0, i, 0)),   # x      [E, M, D]
            pl.BlockSpec((E, D, D), lambda i: (0, 0, 0)),    # weights resident
        ],
        out_specs=pl.BlockSpec((tm, D), lambda i: (i, 0)),   # out    [M, D]
    )

    out_flat = pl.pallas_call(
        _blender_kernel,
        out_shape=jax.ShapeDtypeStruct((M, D), jnp.float32),
        grid_spec=grid_spec,
        compiler_params=pltpu.CompilerParams(
            dimension_semantics=("parallel",)),
    )(scale, x, w)

    return out_flat.reshape(B, S, D)


def bart_blender_ref(hidden_states, blend_factor, weights_t):
    # y[e] = hidden_states[e] @ weights_t[e]; out = einsum('be,ebsd->bsd', bf, y)
    y = jnp.einsum("ebsd,edk->ebsk",
                   hidden_states.astype(jnp.float32),
                   weights_t.astype(jnp.float32),
                   precision=jax.lax.Precision.HIGHEST)
    return jnp.einsum("be,ebsd->bsd", blend_factor.astype(jnp.float32), y)


if __name__ == "__main__":
    # Config (small, deterministic).
    num_expert = 4
    d_model = 128
    batch = 2
    seq = 8
    expert_output_ids = [0, 2, 3]          # active experts (host-side gather)
    E_active = len(expert_output_ids)

    key = jax.random.PRNGKey(0)
    k_w, k_h, k_bf = jax.random.split(key, 3)

    # All num_expert Linear weights (nn.Linear weight shape: [d_model, d_model]).
    all_weights = jax.random.normal(
        k_w, (num_expert, d_model, d_model), dtype=jnp.float32) * 0.02

    # hidden_states passed to forward has one slice per active expert.
    hidden_states = jax.random.normal(
        k_h, (E_active, batch, seq, d_model), dtype=jnp.float32)

    # blend_factor: [batch, E_active] (torch code transposes it to [E, B]).
    blend_factor = jax.nn.softmax(
        jax.random.normal(k_bf, (batch, E_active), dtype=jnp.float32), axis=-1)

    # Gather + transpose active expert weights so the kernel does x @ W.T.
    ids = jnp.asarray(expert_output_ids, dtype=jnp.int32)
    weights_t = jnp.transpose(all_weights[ids], (0, 2, 1))   # [E_active, D, D]

    out = jax.block_until_ready(
        bart_blender(hidden_states, blend_factor, weights_t))

    # Reference on the same bf16-quantized operands (the kernel feeds the MXU
    # bf16 with f32 accumulation, per the performance guidance).
    hs_q = hidden_states.astype(jnp.bfloat16)
    wt_q = weights_t.astype(jnp.bfloat16)
    ref = bart_blender_ref(hs_q, blend_factor, wt_q)

    assert out.shape == (batch, seq, d_model)
    assert jnp.allclose(out, ref, atol=1e-3, rtol=1e-3), "mismatch vs reference"

    print("KERNEL_OK")
</pallas_src>

<mosaic_0001>
module attributes {stable_mosaic.version = 11 : i64} {
  func.func @_blender_kernel(%arg0: i32, %arg1: memref<8x3xf32, #tpu.memory_space<vmem>>, %arg2: memref<3x8x128xbf16, #tpu.memory_space<vmem>>, %arg3: memref<3x128x128xbf16, #tpu.memory_space<vmem>>, %arg4: memref<8x128xf32, #tpu.memory_space<vmem>>) attributes {dimension_semantics = [#tpu.dimension_semantics<parallel>], iteration_bounds = array<i64: 2>, scalar_prefetch = 0 : i64, scratch_operands = 0 : i64, tpu.core_type = #tpu.core_type<tc>, window_params = [{transform_indices = @transform_0, window_bounds = array<i64: 8, 3>}, {transform_indices = @transform_1, window_bounds = array<i64: 3, 8, 128>}, {pipeline_mode = #tpu.pipeline_mode<synchronous>, transform_indices = @transform_2, window_bounds = array<i64: 3, 128, 128>}, {transform_indices = @transform_3, window_bounds = array<i64: 8, 128>}]} {
    %c0 = arith.constant 0 : index
    %c0_0 = arith.constant 0 : index
    %c0_1 = arith.constant 0 : index
    %0 = vector.load %arg2[%c0, %c0_0, %c0_1] : memref<3x8x128xbf16, #tpu.memory_space<vmem>>, vector<1x8x128xbf16>
    %1 = vector.shape_cast %0 : vector<1x8x128xbf16> to vector<8x128xbf16>
    %c0_2 = arith.constant 0 : index
    %c0_3 = arith.constant 0 : index
    %c0_4 = arith.constant 0 : index
    %2 = vector.load %arg3[%c0_2, %c0_3, %c0_4] : memref<3x128x128xbf16, #tpu.memory_space<vmem>>, vector<1x128x128xbf16>
    %3 = vector.shape_cast %2 : vector<1x128x128xbf16> to vector<128x128xbf16>
    %cst = arith.constant dense<0.000000e+00> : vector<8x128xf32>
    %4 = tpu.matmul %1, %3, %cst {dimension_numbers = #tpu.dot_dimension_numbers<[1], [0], [0], [1], [0, 0, 1, 1], [], []>} : vector<8x128xbf16>, vector<128x128xbf16>, vector<8x128xf32> -> vector<8x128xf32>
    %c0_5 = arith.constant 0 : index
    %c0_6 = arith.constant 0 : index
    %5 = vector.load %arg1[%c0_5, %c0_6] : memref<8x3xf32, #tpu.memory_space<vmem>>, vector<8x1xf32>
    %6 = vector.broadcast %5 : vector<8x1xf32> to vector<8x128xf32>
    %7 = arith.mulf %6, %4 : vector<8x128xf32>
    %c1 = arith.constant 1 : index
    %c0_7 = arith.constant 0 : index
    %c0_8 = arith.constant 0 : index
    %8 = vector.load %arg2[%c1, %c0_7, %c0_8] : memref<3x8x128xbf16, #tpu.memory_space<vmem>>, vector<1x8x128xbf16>
    %9 = vector.shape_cast %8 : vector<1x8x128xbf16> to vector<8x128xbf16>
    %c1_9 = arith.constant 1 : index
    %c0_10 = arith.constant 0 : index
    %c0_11 = arith.constant 0 : index
    %10 = vector.load %arg3[%c1_9, %c0_10, %c0_11] : memref<3x128x128xbf16, #tpu.memory_space<vmem>>, vector<1x128x128xbf16>
    %11 = vector.shape_cast %10 : vector<1x128x128xbf16> to vector<128x128xbf16>
    %cst_12 = arith.constant dense<0.000000e+00> : vector<8x128xf32>
    %12 = tpu.matmul %9, %11, %cst_12 {dimension_numbers = #tpu.dot_dimension_numbers<[1], [0], [0], [1], [0, 0, 1, 1], [], []>} : vector<8x128xbf16>, vector<128x128xbf16>, vector<8x128xf32> -> vector<8x128xf32>
    %c0_13 = arith.constant 0 : index
    %c1_14 = arith.constant 1 : index
    %13 = vector.load %arg1[%c0_13, %c1_14] : memref<8x3xf32, #tpu.memory_space<vmem>>, vector<8x1xf32>
    %14 = vector.broadcast %13 : vector<8x1xf32> to vector<8x128xf32>
    %15 = arith.mulf %14, %12 : vector<8x128xf32>
    %16 = arith.addf %7, %15 : vector<8x128xf32>
    %c2 = arith.constant 2 : index
    %c0_15 = arith.constant 0 : index
    %c0_16 = arith.constant 0 : index
    %17 = vector.load %arg2[%c2, %c0_15, %c0_16] : memref<3x8x128xbf16, #tpu.memory_space<vmem>>, vector<1x8x128xbf16>
    %18 = vector.shape_cast %17 : vector<1x8x128xbf16> to vector<8x128xbf16>
    %c2_17 = arith.constant 2 : index
    %c0_18 = arith.constant 0 : index
    %c0_19 = arith.constant 0 : index
    %19 = vector.load %arg3[%c2_17, %c0_18, %c0_19] : memref<3x128x128xbf16, #tpu.memory_space<vmem>>, vector<1x128x128xbf16>
    %20 = vector.shape_cast %19 : vector<1x128x128xbf16> to vector<128x128xbf16>
    %cst_20 = arith.constant dense<0.000000e+00> : vector<8x128xf32>
    %21 = tpu.matmul %18, %20, %cst_20 {dimension_numbers = #tpu.dot_dimension_numbers<[1], [0], [0], [1], [0, 0, 1, 1], [], []>} : vector<8x128xbf16>, vector<128x128xbf16>, vector<8x128xf32> -> vector<8x128xf32>
    %c0_21 = arith.constant 0 : index
    %c2_22 = arith.constant 2 : index
    %22 = vector.load %arg1[%c0_21, %c2_22] : memref<8x3xf32, #tpu.memory_space<vmem>>, vector<8x1xf32>
    %23 = vector.broadcast %22 : vector<8x1xf32> to vector<8x128xf32>
    %24 = arith.mulf %23, %21 : vector<8x128xf32>
    %25 = arith.addf %16, %24 : vector<8x128xf32>
    %c0_23 = arith.constant 0 : index
    %c0_24 = arith.constant 0 : index
    %26 = vector.load %arg4[%c0_23, %c0_24] : memref<8x128xf32, #tpu.memory_space<vmem>>, vector<8x128xf32>
    tpu.vector_store %arg4[%c0_23, %c0_24], %25 {strides = array<i32>} : memref<8x128xf32, #tpu.memory_space<vmem>>, vector<8x128xf32>,
    return
  }
  func.func @transform_0(%arg0: i32) -> (i32, i32) {
    %c0_i32 = arith.constant 0 : i32
    %c0_i32_0 = arith.constant 0 : i32
    return %arg0, %c0_i32 : i32, i32
  }
  func.func @transform_1(%arg0: i32) -> (i32, i32, i32) {
    %c0_i32 = arith.constant 0 : i32
    %c0_i32_0 = arith.constant 0 : i32
    %c0_i32_1 = arith.constant 0 : i32
    return %c0_i32, %arg0, %c0_i32_0 : i32, i32, i32
  }
  func.func @transform_2(%arg0: i32) -> (i32, i32, i32) {
    %c0_i32 = arith.constant 0 : i32
    %c0_i32_0 = arith.constant 0 : i32
    %c0_i32_1 = arith.constant 0 : i32
    %c0_i32_2 = arith.constant 0 : i32
    return %c0_i32, %c0_i32_0, %c0_i32_1 : i32, i32, i32
  }
  func.func @transform_3(%arg0: i32) -> (i32, i32) {
    %c0_i32 = arith.constant 0 : i32
    %c0_i32_0 = arith.constant 0 : i32
    return %arg0, %c0_i32 : i32, i32
  }
}

</mosaic_0001>

<llo_original>
// kernel: tpu_custom_call.1
$region0: #{tpu_custom_call.1}
  #allocation0 [shape = 'u32[]', space=smem, size = 0x4, offset = 0x4, fixed_abs, tag = 'smem constant byte address 0x4 - core index']
  #allocation1 [shape = 'u32[144,128]{1,0:T(1,128)}', space=vmem, size = 0x12000, scoped, tag = 'internal scratch']
  %s0 = inlined_call_operand.vmem [shape: f32[16,3], index: 0, kind: input, shape index: {}]
  %s1 = inlined_call_operand.hbm [shape: bf16[3,16,128], index: 1, kind: input, shape index: {}]
  %s2 = inlined_call_operand.hbm [shape: bf16[3,128,128], index: 2, kind: input, shape index: {}]
  %s3 = inlined_call_operand.hbm [shape: f32[16,128], index: 3, kind: output, shape index: {}]
  %s4 = sld [smem:[#allocation0]]
  $region53: #{tpu_custom_call.1} parent=0
    _
  %s6 = ssub.s32 1, %s4
  %s7 = scalar_select 0, %s6, %s4
  $region1: #{tpu_custom_call.1} parent=0
    #allocation2 [shape = 'u8[12288]{0}', space=vmem, size = 0x3000, scoped, tag = 'input window, operand 1']
    #allocation3 [shape = 's32[2]{0}', space=sflag, size = 0x8, scoped, tag = 'scoped memory for tpu_custom_call.1']
    #allocation4 [shape = 's32[2]{0}', space=sflag, size = 0x8, scoped, tag = 'scoped memory for tpu_custom_call.1']
    #allocation5 [shape = 'u8[98304]{0}', space=vmem, size = 0x18000, scoped, tag = 'input window, operand 2, single buffered']
    #allocation6 [shape = 's32[1]{0}', space=sflag, size = 0x4, scoped, tag = 'scoped memory for tpu_custom_call.1']
    #allocation7 [shape = 'u8[8192]{0}', space=vmem, size = 0x2000, scoped, tag = 'output window, operand 0']
    %8 = vsyncpa [#allocation3], 0
    %s9 = scalar_lea.sflag [#allocation3], 1
    %10 = vsyncpa %s9, 0
    %11 = vsyncpa [#allocation6], 0
    %12 = vsyncpa [#allocation4], 0
    %s13 = scalar_lea.sflag [#allocation4], 1
    %14 = vsyncpa %s13, 0
    loop: start=0, step=1, limit=4
    $region2: #{tpu_custom_call.1} parent=1 // loop_pre_header
      _
    $region3: #{tpu_custom_call.1} parent=1 // loop_header
      %s16 = sphi 0, %s20
      %p17 = scmp.ge.s32.totalorder %s16, 4
      %s26 = sphi 0, %s28
      %s29 = sphi 0, %s26
      %s30 = sphi 0, %s29
      %s46 = sphi 0, %s30
      %s52 = sphi 0, %s54
      %s55 = sphi 0, %s52
      %s56 = sphi 0, %s55
      %s72 = sphi 0, %s56
      %s76 = sphi 0, %s76
      %s78 = sphi 0, %s76
      %s79 = sphi 0, %s78
      %s93 = sphi 0, %s79
      %s99 = sphi 0, %s101
      %s102 = sphi 0, %s99
      %s103 = sphi 0, %s102
      %s119 = sphi 0, %s103
    $region4: #{tpu_custom_call.1} parent=1 // loop_header_branch
      %19 = sbr.rel (%p17) target = $region8
    $region5: #{tpu_custom_call.1} parent=1 // loop_body
      %s21 = ssub.s32 %s16, 1
      %s22 = ssub.s32 %s16, 2
      %s23 = sadd.s32 %s16, 1
      %s24 = ssub.s32 %s16, %s23
      %p25 = scmp.eq.s32.totalorder %s24, 0
      %s27 = sadd.s32 %s26, 1
      %s28 = scalar_select %p25, %s26, %s27
      %p31 = pneg %p25
      %p32 = scmp.eq.s32.totalorder %s16, 1
      %p33 = por %p31, %p32
      %p34 = scmp.ne.s32.totalorder %s26, %s29
      %p35 = scmp.eq.s32.totalorder %s16, 0
      %p36 = por %p34, %p35
      %p37 = scmp.ne.s32.totalorder %s26, %s29
      %p38 = scmp.eq.s32.totalorder %s21, 1
      %p39 = por %p37, %p38
      %p40 = scmp.ne.s32.totalorder %s29, %s30
      %p41 = scmp.eq.s32.totalorder %s21, 0
      %p42 = por %p40, %p41
      %p43 = scmp.ne.s32.totalorder %s29, %s30
      %p44 = scmp.eq.s32.totalorder %s22, 1
      %p45 = por %p43, %p44
      %p47 = scmp.ne.s32.totalorder %s30, %s46
      %p48 = scmp.eq.s32.totalorder %s22, 0
      %p49 = por %p47, %p48
      %s50 = ssub.s32 %s16, %s23
      %p51 = scmp.eq.s32.totalorder %s50, 0
      %s53 = sadd.s32 %s52, 1
      %s54 = scalar_select %p51, %s52, %s53
      %p57 = pneg %p51
      %p58 = scmp.eq.s32.totalorder %s16, 1
      %p59 = por %p57, %p58
      %p60 = scmp.ne.s32.totalorder %s52, %s55
      %p61 = scmp.eq.s32.totalorder %s16, 0
      %p62 = por %p60, %p61
      %p63 = scmp.ne.s32.totalorder %s52, %s55
      %p64 = scmp.eq.s32.totalorder %s21, 1
      %p65 = por %p63, %p64
      %p66 = scmp.ne.s32.totalorder %s55, %s56
      %p67 = scmp.eq.s32.totalorder %s21, 0
      %p68 = por %p66, %p67
      %p69 = scmp.ne.s32.totalorder %s55, %s56
      %p70 = scmp.eq.s32.totalorder %s22, 1
      %p71 = por %p69, %p70
      %p73 = scmp.ne.s32.totalorder %s56, %s72
      %p74 = scmp.eq.s32.totalorder %s22, 0
      %p75 = por %p73, %p74
      %s77 = sadd.s32 %s76, 1
      %p80 = scmp.eq.s32.totalorder %s16, 1
      %p81 = scmp.ne.s32.totalorder %s76, %s78
      %p82 = scmp.eq.s32.totalorder %s16, 0
      %p83 = por %p81, %p82
      %p84 = scmp.ne.s32.totalorder %s76, %s78
      %p85 = scmp.eq.s32.totalorder %s21, 1
      %p86 = por %p84, %p85
      %p87 = scmp.ne.s32.totalorder %s78, %s79
      %p88 = scmp.eq.s32.totalorder %s21, 0
      %p89 = por %p87, %p88
      %p90 = scmp.ne.s32.totalorder %s78, %s79
      %p91 = scmp.eq.s32.totalorder %s22, 1
      %p92 = por %p90, %p91
      %p94 = scmp.ne.s32.totalorder %s79, %s93
      %p95 = scmp.eq.s32.totalorder %s22, 0
      %p96 = por %p94, %p95
      %s97 = ssub.s32 %s16, %s23
      %p98 = scmp.eq.s32.totalorder %s97, 0
      %s100 = sadd.s32 %s99, 1
      %s101 = scalar_select %p98, %s99, %s100
      %p104 = pneg %p98
      %p105 = scmp.eq.s32.totalorder %s16, 1
      %p106 = por %p104, %p105
      %p107 = scmp.ne.s32.totalorder %s99, %s102
      %p108 = scmp.eq.s32.totalorder %s16, 0
      %p109 = por %p107, %p108
      %p110 = scmp.ne.s32.totalorder %s99, %s102
      %p111 = scmp.eq.s32.totalorder %s21, 1
      %p112 = por %p110, %p111
      %p113 = scmp.ne.s32.totalorder %s102, %s103
      %p114 = scmp.eq.s32.totalorder %s21, 0
      %p115 = por %p113, %p114
      %p116 = scmp.ne.s32.totalorder %s102, %s103
      %p117 = scmp.eq.s32.totalorder %s22, 1
      %p118 = por %p116, %p117
      %p120 = scmp.ne.s32.totalorder %s103, %s119
      %p121 = scmp.eq.s32.totalorder %s22, 0
      %p122 = por %p120, %p121
      %p123 = scmp.le.s32.totalorder 1, %s16
      %p124 = scmp.lt.s32.totalorder %s16, 3
      %p125 = pnand %p123, %p124
      %p126 = pneg %p125
      // Predicated region
      $region9: #{tpu_custom_call.1} parent=5 // pred_check
        _
      $region10: #{tpu_custom_call.1} parent=5 // pred_check_branch
        %128 = sbr.rel (%p125) target = $region12
      $region11: #{tpu_custom_call.1} parent=5 // pred_region
        %s129 = ssub.s32 %s16, 1
        // Predicated region
        $region13: #{tpu_custom_call.1} parent=11 // pred_check
          %p130 = pneg %p89
        $region14: #{tpu_custom_call.1} parent=11 // pred_check_branch
          %132 = sbr.rel (%p130) target = $region16
        $region15: #{tpu_custom_call.1} parent=11 // pred_region
          %s134 = ssub.s32 3072, 3072
          %135 = vsyncadd [#allocation6], %s134
          %s136 = sshll.u32 [#allocation5], 4
          %s137 = int_to_ptr.vmem [resolvable:$true] %s136
          %142 = dma.hbm_to_vmem [thread:$0]  %s2, 3072, %s137, [#allocation6], 64, 64, 4
        $region16: #{tpu_custom_call.1} parent=11 // pred_fallthru
          _
      $region12: #{tpu_custom_call.1} parent=5 // pred_fallthru
        _
      %p143 = scmp.lt.s32.totalorder %s16, 2
      // Predicated region
      $region17: #{tpu_custom_call.1} parent=5 // pred_check
        %p144 = pneg %p143
      $region18: #{tpu_custom_call.1} parent=5 // pred_check_branch
        %146 = sbr.rel (%p144) target = $region20
      $region19: #{tpu_custom_call.1} parent=5 // pred_region
        // Predicated region
        $region21: #{tpu_custom_call.1} parent=19 // pred_check
          %p147 = pneg %p36
        $region22: #{tpu_custom_call.1} parent=19 // pred_check_branch
          %149 = sbr.rel (%p147) target = $region24
        $region23: #{tpu_custom_call.1} parent=19 // pred_region
          %p150 = scmp.lt.s32.totalorder %s16, 1
          %s151 = scalar_select %p150, %s16, 1
          %s152 = smul.addr %s151, 8
          %s153 = scalar_lea.vmem %s0, %s152
        $region24: #{tpu_custom_call.1} parent=19 // pred_fallthru
          _
        // Predicated region
        $region25: #{tpu_custom_call.1} parent=19 // pred_check
          %p154 = pneg %p62
        $region26: #{tpu_custom_call.1} parent=19 // pred_check_branch
          %156 = sbr.rel (%p154) target = $region28
        $region27: #{tpu_custom_call.1} parent=19 // pred_region
          %s157 = sand.u32 %s52, 1
          %s158 = scalar_lea.sflag [#allocation3], %s157
          %s159 = sand.u32 %s52, 1
          %s160 = smul.addr %s159, 12
          %s161 = scalar_lea.vmem [#allocation2], %s160
          %s163 = ssub.s32 192, 192
          %164 = vsyncadd %s158, %s163
          %s165 = smul.addr %s16, 64
          %s166 = scalar_lea.hbm %s1, %s165
          %s167 = sshll.u32 %s161, 4
          %s168 = int_to_ptr.vmem [resolvable:$true] %s167
          %173 = dma.hbm_to_vmem [thread:$0]  %s166, 192, %s168, %s158, 128, 64, 4
        $region28: #{tpu_custom_call.1} parent=19 // pred_fallthru
          _
      $region20: #{tpu_custom_call.1} parent=5 // pred_fallthru
        _
      %p174 = scmp.le.s32.totalorder 1, %s16
      %p175 = scmp.lt.s32.totalorder %s16, 3
      %p176 = pnand %p174, %p175
      %p177 = pneg %p176
      // Predicated region
      $region29: #{tpu_custom_call.1} parent=5 // pred_check
        _
      $region30: #{tpu_custom_call.1} parent=5 // pred_check_branch
        %179 = sbr.rel (%p176) target = $region32
      $region31: #{tpu_custom_call.1} parent=5 // pred_region
        %s180 = ssub.s32 %s16, 1
        %s181 = sand.u32 %s55, 1
        %s182 = scalar_lea.sflag [#allocation3], %s181
        %s183 = sand.u32 %s55, 1
        %s184 = smul.addr %s183, 12
        %s185 = scalar_lea.vmem [#allocation2], %s184
        // Predicated region
        $region33: #{tpu_custom_call.1} parent=31 // pred_check
          %p186 = pneg %p68
        $region34: #{tpu_custom_call.1} parent=31 // pred_check_branch
          %188 = sbr.rel (%p186) target = $region36
        $region35: #{tpu_custom_call.1} parent=31 // pred_region
          %189 = dma.done %s182, 192
        $region36: #{tpu_custom_call.1} parent=31 // pred_fallthru
          _
        // Predicated region
        $region37: #{tpu_custom_call.1} parent=31 // pred_check
          %p190 = pneg %p89
        $region38: #{tpu_custom_call.1} parent=31 // pred_check_branch
          %192 = sbr.rel (%p190) target = $region40
        $region39: #{tpu_custom_call.1} parent=31 // pred_region
          %193 = dma.done [#allocation6], 3072
        $region40: #{tpu_custom_call.1} parent=31 // pred_fallthru
          _
        %p194 = scmp.lt.s32.totalorder %s21, 1
        %s195 = scalar_select %p194, %s21, 1
        %s196 = smul.addr %s195, 8
        %s197 = scalar_lea.vmem %s0, %s196
        %p198 = pneg %p42
        %p199 = pneg %p39
        %s200 = sand.u32 %s55, 1
        %s201 = scalar_lea.sflag [#allocation3], %s200
        %s202 = sand.u32 %s55, 1
        %s203 = smul.addr %s202, 12
        %s204 = scalar_lea.vmem [#allocation2], %s203
        %p205 = pneg %p68
        %p206 = pneg %p65
        %p207 = pneg %p89
        %p208 = pneg %p86
        %p209 = pneg %p115
        %p210 = pneg %p112
        %s211 = sand.u32 %s102, 1
        %s212 = scalar_lea.sflag [#allocation4], %s211
        %s213 = sand.u32 %s102, 1
        %s214 = smul.addr %s213, 8
        %s215 = scalar_lea.vmem [#allocation7], %s214
        %p216 = scmp.lt.s32.totalorder %s21, 1
        %s217 = scalar_select %p216, %s21, 1
        %s218 = smul.addr %s217, 8
        %s219 = scalar_lea.vmem %s0, %s218
        %v221 = vld [vmem:[%s185] sm:$0xf]
        %v222 = vld [vmem:[#allocation5] sm:$0xf]
        %v223 = vld [vmem:[#allocation5 + $0x4] sm:$0xf]
        %v224 = vld [vmem:[#allocation5 + $0x8] sm:$0xf]
        %v225 = vld [vmem:[#allocation5 + $0xc] sm:$0xf]
        %v226 = vld [vmem:[#allocation5 + $0x10] sm:$0xf]
        %v227 = vld [vmem:[#allocation5 + $0x14] sm:$0xf]
        %v228 = vld [vmem:[#allocation5 + $0x18] sm:$0xf]
        %v229 = vld [vmem:[#allocation5 + $0x1c] sm:$0xf]
        %v230 = vld [vmem:[#allocation5 + $0x20] sm:$0xf]
        %v231 = vld [vmem:[#allocation5 + $0x24] sm:$0xf]
        %v232 = vld [vmem:[#allocation5 + $0x28] sm:$0xf]
        %v233 = vld [vmem:[#allocation5 + $0x2c] sm:$0xf]
        %v234 = vld [vmem:[#allocation5 + $0x30] sm:$0xf]
        %v235 = vld [vmem:[#allocation5 + $0x34] sm:$0xf]
        %v236 = vld [vmem:[#allocation5 + $0x38] sm:$0xf]
        %v237 = vld [vmem:[#allocation5 + $0x3c] sm:$0xf]
        %v254 = vunpack.c.l.b16 %v222
        %v255 = vunpack.c.l.b16 %v223
        %v256 = vunpack.c.l.b16 %v224
        %v257 = vunpack.c.l.b16 %v225
        %v258 = vunpack.c.l.b16 %v226
        %v259 = vunpack.c.l.b16 %v227
        %v260 = vunpack.c.l.b16 %v228
        %v261 = vunpack.c.l.b16 %v229
        %v262 = vunpack.c.l.b16 %v230
        %v263 = vunpack.c.l.b16 %v231
        %v264 = vunpack.c.l.b16 %v232
        %v265 = vunpack.c.l.b16 %v233
        %v266 = vunpack.c.l.b16 %v234
        %v267 = vunpack.c.l.b16 %v235
        %v268 = vunpack.c.l.b16 %v236
        %v269 = vunpack.c.l.b16 %v237
        %v270 = vpack.c.b16 %v255, %v254
        %v271 = vpack.c.b16 %v257, %v256
        %v272 = vpack.c.b16 %v259, %v258
        %v273 = vpack.c.b16 %v261, %v260
        %v274 = vpack.c.b16 %v263, %v262
        %v275 = vpack.c.b16 %v265, %v264
        %v276 = vpack.c.b16 %v267, %v266
        %v277 = vpack.c.b16 %v269, %v268
        %286 = vmatprep.subr.bf16.mxu0 0
        %287 = vmatpush1.bf16.msra.mxu0 %v270
        %288 = vmatprep.subr.bf16.mxu0 0
        %289 = vmatpush1.bf16.msra.mxu0 %v271
        %290 = vmatprep.subr.bf16.mxu0 0
        %291 = vmatpush1.bf16.msra.mxu0 %v272
        %292 = vmatprep.subr.bf16.mxu0 0
        %293 = vmatpush1.bf16.msra.mxu0 %v273
        %294 = vmatprep.subr.bf16.mxu0 0
        %295 = vmatpush1.bf16.msra.mxu0 %v274
        %296 = vmatprep.subr.bf16.mxu0 0
        %297 = vmatpush1.bf16.msra.mxu0 %v275
        %298 = vmatprep.subr.bf16.mxu0 0
        %299 = vmatpush1.bf16.msra.mxu0 %v276
        %300 = vmatprep.subr.bf16.mxu0 0
        %301 = vmatpush1.bf16.msra.mxu0 %v277
        %302 = vmatprep.subr.bf16.mxu0 0
        %303 = vmatpush1.bf16.msra.mxu0 0
        %304 = vmatprep.subr.bf16.mxu0 0
        %305 = vmatpush1.bf16.msra.mxu0 0
        %306 = vmatprep.subr.bf16.mxu0 0
        %307 = vmatpush1.bf16.msra.mxu0 0
        %308 = vmatprep.subr.bf16.mxu0 0
        %309 = vmatpush1.bf16.msra.mxu0 0
        %310 = vmatprep.subr.bf16.mxu0 0
        %311 = vmatpush1.bf16.msra.mxu0 0
        %312 = vmatprep.subr.bf16.mxu0 0
        %313 = vmatpush1.bf16.msra.mxu0 0
        %314 = vmatprep.subr.bf16.mxu0 0
        %315 = vmatpush1.bf16.msra.mxu0 0
        %316 = vmatprep.subr.bf16.mxu0 0
        %317 = vmatpush1.bf16.msra.mxu0 0
        %318 = vmatprep.mubr.bf16.mxu0 0
        %319 = vmatmul.mubr.bf16.gmra.mrb[0].mxu0 %v221
        %v320 = vpop.f32.mrb[0].mxu0
        %v321 = vadd.f32 0.0, %v320
        %v322 = vpop.f32.mrb[0].mxu0
        %v323 = vpop.f32.mrb[0].mxu0
        %v324 = vpop.f32.mrb[0].mxu0
        %325 = vdwg.mxu0
        %v326 = vld [vmem:[%s219] sm:$0xff]
        %328 = vset.pattern.permute.xlu0 0
        %329 = vperm.xlu0 %328, %v326
        %v330 = vpop.permute.xlu0 %329
        %v332 = vmul.f32 %v330, %v321
        %s333 = scalar_lea.vmem %s185, 4 [#allocation2]
        %v334 = vld [vmem:[%s333] sm:$0xf]
        %s335 = scalar_lea.vmem [#allocation5], 64
        %v336 = vld [vmem:[%s335] sm:$0xf]
        %v337 = vld [vmem:[%s335 + $0x4] sm:$0xf]
        %v338 = vld [vmem:[%s335 + $0x8] sm:$0xf]
        %v339 = vld [vmem:[%s335 + $0xc] sm:$0xf]
        %v340 = vld [vmem:[%s335 + $0x10] sm:$0xf]
        %v341 = vld [vmem:[%s335 + $0x14] sm:$0xf]
        %v342 = vld [vmem:[%s335 + $0x18] sm:$0xf]
        %v343 = vld [vmem:[%s335 + $0x1c] sm:$0xf]
        %v344 = vld [vmem:[%s335 + $0x20] sm:$0xf]
        %v345 = vld [vmem:[%s335 + $0x24] sm:$0xf]
        %v346 = vld [vmem:[%s335 + $0x28] sm:$0xf]
        %v347 = vld [vmem:[%s335 + $0x2c] sm:$0xf]
        %v348 = vld [vmem:[%s335 + $0x30] sm:$0xf]
        %v349 = vld [vmem:[%s335 + $0x34] sm:$0xf]
        %v350 = vld [vmem:[%s335 + $0x38] sm:$0xf]
        %v351 = vld [vmem:[%s335 + $0x3c] sm:$0xf]
        %v368 = vunpack.c.l.b16 %v336
        %v369 = vunpack.c.l.b16 %v337
        %v370 = vunpack.c.l.b16 %v338
        %v371 = vunpack.c.l.b16 %v339
        %v372 = vunpack.c.l.b16 %v340
        %v373 = vunpack.c.l.b16 %v341
        %v374 = vunpack.c.l.b16 %v342
        %v375 = vunpack.c.l.b16 %v343
        %v376 = vunpack.c.l.b16 %v344
        %v377 = vunpack.c.l.b16 %v345
        %v378 = vunpack.c.l.b16 %v346
        %v379 = vunpack.c.l.b16 %v347
        %v380 = vunpack.c.l.b16 %v348
        %v381 = vunpack.c.l.b16 %v349
        %v382 = vunpack.c.l.b16 %v350
        %v383 = vunpack.c.l.b16 %v351
        %v384 = vpack.c.b16 %v369, %v368
        %v385 = vpack.c.b16 %v371, %v370
        %v386 = vpack.c.b16 %v373, %v372
        %v387 = vpack.c.b16 %v375, %v374
        %v388 = vpack.c.b16 %v377, %v376
        %v389 = vpack.c.b16 %v379, %v378
        %v390 = vpack.c.b16 %v381, %v380
        %v391 = vpack.c.b16 %v383, %v382
        %400 = vmatprep.subr.bf16.mxu0 0
        %401 = vmatpush1.bf16.msra.mxu0 %v384
        %402 = vmatprep.subr.bf16.mxu0 0
        %403 = vmatpush1.bf16.msra.mxu0 %v385
        %404 = vmatprep.subr.bf16.mxu0 0
        %405 = vmatpush1.bf16.msra.mxu0 %v386
        %406 = vmatprep.subr.bf16.mxu0 0
        %407 = vmatpush1.bf16.msra.mxu0 %v387
        %408 = vmatprep.subr.bf16.mxu0 0
        %409 = vmatpush1.bf16.msra.mxu0 %v388
        %410 = vmatprep.subr.bf16.mxu0 0
        %411 = vmatpush1.bf16.msra.mxu0 %v389
        %412 = vmatprep.subr.bf16.mxu0 0
        %413 = vmatpush1.bf16.msra.mxu0 %v390
        %414 = vmatprep.subr.bf16.mxu0 0
        %415 = vmatpush1.bf16.msra.mxu0 %v391
        %416 = vmatprep.subr.bf16.mxu0 0
        %417 = vmatpush1.bf16.msra.mxu0 0
        %418 = vmatprep.subr.bf16.mxu0 0
        %419 = vmatpush1.bf16.msra.mxu0 0
        %420 = vmatprep.subr.bf16.mxu0 0
        %421 = vmatpush1.bf16.msra.mxu0 0
        %422 = vmatprep.subr.bf16.mxu0 0
        %423 = vmatpush1.bf16.msra.mxu0 0
        %424 = vmatprep.subr.bf16.mxu0 0
        %425 = vmatpush1.bf16.msra.mxu0 0
        %426 = vmatprep.subr.bf16.mxu0 0
        %427 = vmatpush1.bf16.msra.mxu0 0
        %428 = vmatprep.subr.bf16.mxu0 0
        %429 = vmatpush1.bf16.msra.mxu0 0
        %430 = vmatprep.subr.bf16.mxu0 0
        %431 = vmatpush1.bf16.msra.mxu0 0
        %432 = vmatprep.mubr.bf16.mxu0 0
        %433 = vmatmul.mubr.bf16.gmra.mrb[0].mxu0 %v334
        %v434 = vpop.f32.mrb[0].mxu0
        %v435 = vadd.f32 0.0, %v434
        %v436 = vpop.f32.mrb[0].mxu0
        %v437 = vpop.f32.mrb[0].mxu0
        %v438 = vpop.f32.mrb[0].mxu0
        %439 = vdwg.mxu0
        %440 = vset.pattern.permute.xlu0 1
        %441 = vperm.xlu0 %440, %v326
        %v442 = vpop.permute.xlu0 %441
        %v444 = vmul.f32 %v442, %v435
        %v445 = vadd.f32 %v332, %v444
        %s446 = scalar_lea.vmem %s185, 8 [#allocation2]
        %v447 = vld [vmem:[%s446] sm:$0xf]
        %s448 = scalar_lea.vmem [#allocation5], 128
        %v449 = vld [vmem:[%s448] sm:$0xf]
        %v450 = vld [vmem:[%s448 + $0x4] sm:$0xf]
        %v451 = vld [vmem:[%s448 + $0x8] sm:$0xf]
        %v452 = vld [vmem:[%s448 + $0xc] sm:$0xf]
        %v453 = vld [vmem:[%s448 + $0x10] sm:$0xf]
        %v454 = vld [vmem:[%s448 + $0x14] sm:$0xf]
        %v455 = vld [vmem:[%s448 + $0x18] sm:$0xf]
        %v456 = vld [vmem:[%s448 + $0x1c] sm:$0xf]
        %v457 = vld [vmem:[%s448 + $0x20] sm:$0xf]
        %v458 = vld [vmem:[%s448 + $0x24] sm:$0xf]
        %v459 = vld [vmem:[%s448 + $0x28] sm:$0xf]
        %v460 = vld [vmem:[%s448 + $0x2c] sm:$0xf]
        %v461 = vld [vmem:[%s448 + $0x30] sm:$0xf]
        %v462 = vld [vmem:[%s448 + $0x34] sm:$0xf]
        %v463 = vld [vmem:[%s448 + $0x38] sm:$0xf]
        %v464 = vld [vmem:[%s448 + $0x3c] sm:$0xf]
        %v481 = vunpack.c.l.b16 %v449
        %v482 = vunpack.c.l.b16 %v450
        %v483 = vunpack.c.l.b16 %v451
        %v484 = vunpack.c.l.b16 %v452
        %v485 = vunpack.c.l.b16 %v453
        %v486 = vunpack.c.l.b16 %v454
        %v487 = vunpack.c.l.b16 %v455
        %v488 = vunpack.c.l.b16 %v456
        %v489 = vunpack.c.l.b16 %v457
        %v490 = vunpack.c.l.b16 %v458
        %v491 = vunpack.c.l.b16 %v459
        %v492 = vunpack.c.l.b16 %v460
        %v493 = vunpack.c.l.b16 %v461
        %v494 = vunpack.c.l.b16 %v462
        %v495 = vunpack.c.l.b16 %v463
        %v496 = vunpack.c.l.b16 %v464
        %v497 = vpack.c.b16 %v482, %v481
        %v498 = vpack.c.b16 %v484, %v483
        %v499 = vpack.c.b16 %v486, %v485
        %v500 = vpack.c.b16 %v488, %v487
        %v501 = vpack.c.b16 %v490, %v489
        %v502 = vpack.c.b16 %v492, %v491
        %v503 = vpack.c.b16 %v494, %v493
        %v504 = vpack.c.b16 %v496, %v495
        %513 = vmatprep.subr.bf16.mxu0 0
        %514 = vmatpush1.bf16.msra.mxu0 %v497
        %515 = vmatprep.subr.bf16.mxu0 0
        %516 = vmatpush1.bf16.msra.mxu0 %v498
        %517 = vmatprep.subr.bf16.mxu0 0
        %518 = vmatpush1.bf16.msra.mxu0 %v499
        %519 = vmatprep.subr.bf16.mxu0 0
        %520 = vmatpush1.bf16.msra.mxu0 %v500
        %521 = vmatprep.subr.bf16.mxu0 0
        %522 = vmatpush1.bf16.msra.mxu0 %v501
        %523 = vmatprep.subr.bf16.mxu0 0
        %524 = vmatpush1.bf16.msra.mxu0 %v502
        %525 = vmatprep.subr.bf16.mxu0 0
        %526 = vmatpush1.bf16.msra.mxu0 %v503
        %527 = vmatprep.subr.bf16.mxu0 0
        %528 = vmatpush1.bf16.msra.mxu0 %v504
        %529 = vmatprep.subr.bf16.mxu0 0
        %530 = vmatpush1.bf16.msra.mxu0 0
        %531 = vmatprep.subr.bf16.mxu0 0
        %532 = vmatpush1.bf16.msra.mxu0 0
        %533 = vmatprep.subr.bf16.mxu0 0
        %534 = vmatpush1.bf16.msra.mxu0 0
        %535 = vmatprep.subr.bf16.mxu0 0
        %536 = vmatpush1.bf16.msra.mxu0 0
        %537 = vmatprep.subr.bf16.mxu0 0
        %538 = vmatpush1.bf16.msra.mxu0 0
        %539 = vmatprep.subr.bf16.mxu0 0
        %540 = vmatpush1.bf16.msra.mxu0 0
        %541 = vmatprep.subr.bf16.mxu0 0
        %542 = vmatpush1.bf16.msra.mxu0 0
        %543 = vmatprep.subr.bf16.mxu0 0
        %544 = vmatpush1.bf16.msra.mxu0 0
        %545 = vmatprep.mubr.bf16.mxu0 0
        %546 = vmatmul.mubr.bf16.gmra.mrb[0].mxu0 %v447
        %v547 = vpop.f32.mrb[0].mxu0
        %v548 = vadd.f32 0.0, %v547
        %v549 = vpop.f32.mrb[0].mxu0
        %v550 = vpop.f32.mrb[0].mxu0
        %v551 = vpop.f32.mrb[0].mxu0
        %552 = vdwg.mxu0
        %553 = vset.pattern.permute.xlu0 2
        %554 = vperm.xlu0 %553, %v326
        %v555 = vpop.permute.xlu0 %554
        %v557 = vmul.f32 %v555, %v548
        %v558 = vadd.f32 %v445, %v557
        %559 = vst [vmem:[%s215] sm:$0xff] %v558
        %s560 = sand.u32 %s102, 1
        %s561 = scalar_lea.sflag [#allocation4], %s560
        %s562 = sand.u32 %s102, 1
        %s563 = smul.addr %s562, 8
        %s564 = scalar_lea.vmem [#allocation7], %s563
        // Predicated region
        $region41: #{tpu_custom_call.1} parent=31 // pred_check
          %p565 = pneg %p112
        $region42: #{tpu_custom_call.1} parent=31 // pred_check_branch
          %567 = sbr.rel (%p565) target = $region44
        $region43: #{tpu_custom_call.1} parent=31 // pred_region
          %s569 = ssub.s32 128, 128
          %570 = vsyncadd %s561, %s569
          %s571 = smul.addr %s21, 128
          %s572 = scalar_lea.hbm %s3, %s571
          %s574 = sshll.u32 %s564, 4
          %s575 = int_to_ptr.vmem [resolvable:$true] %s574
          %577 = dma.vmem_to_hbm [thread:$0]  %s575, 128, %s572, %s561
        $region44: #{tpu_custom_call.1} parent=31 // pred_fallthru
          _
      $region32: #{tpu_custom_call.1} parent=5 // pred_fallthru
        _
      %p578 = scmp.le.s32.totalorder 2, %s16
      // Predicated region
      $region45: #{tpu_custom_call.1} parent=5 // pred_check
        %p579 = pneg %p578
      $region46: #{tpu_custom_call.1} parent=5 // pred_check_branch
        %581 = sbr.rel (%p579) target = $region48
      $region47: #{tpu_custom_call.1} parent=5 // pred_region
        %s582 = ssub.s32 %s16, 2
        // Predicated region
        $region49: #{tpu_custom_call.1} parent=47 // pred_check
          %p583 = pneg %p118
        $region50: #{tpu_custom_call.1} parent=47 // pred_check_branch
          %585 = sbr.rel (%p583) target = $region52
        $region51: #{tpu_custom_call.1} parent=47 // pred_region
          %s586 = sand.u32 %s103, 1
          %s587 = scalar_lea.sflag [#allocation4], %s586
          %s588 = sand.u32 %s103, 1
          %s589 = smul.addr %s588, 8
          %s590 = scalar_lea.vmem [#allocation7], %s589
          %591 = dma.done %s587, 128
        $region52: #{tpu_custom_call.1} parent=47 // pred_fallthru
          _
      $region48: #{tpu_custom_call.1} parent=5 // pred_fallthru
        _
    $region6: #{tpu_custom_call.1} parent=1 // loop_footer
      %s20 = sadd.s32 1, %s16
    $region7: #{tpu_custom_call.1} parent=1 // loop_footer_branch
      %15 = sbr.rel target = $region3
    $region8: #{tpu_custom_call.1} parent=1 // loop_exit
      _
    %592 = vsyncpa [#allocation3], 1
    %s593 = scalar_lea.sflag [#allocation3], 1
    %594 = vsyncpa %s593, 1
    %595 = vsyncpa [#allocation6], 1
    %596 = vsyncpa [#allocation4], 1
    %s597 = scalar_lea.sflag [#allocation4], 1
    %598 = vsyncpa %s597, 1

</llo_original>
